<compile_context>
chip_gen: v5e
topology: v5e:2x2
jax: 0.10.0
libtpu: 0.0.40
codegen_flags: <defaults>
</compile_context>

<pallas_src>
import functools

import jax
import jax.numpy as jnp
from jax.experimental import pallas as pl
from jax.experimental.pallas import tpu as pltpu


def _layernorm_block(x1, x2, gamma, beta, *, eps, d_model):
    """LayerNorm(x1 + x2) on a [rows, d_model] tile (f32 accumulation)."""
    s = x1.astype(jnp.float32) + x2.astype(jnp.float32)
    # One-pass statistics: a single sweep produces both reductions.
    ssum = jnp.sum(s, axis=-1, keepdims=True)
    sqsum = jnp.sum(s * s, axis=-1, keepdims=True)
    mean = ssum * (1.0 / d_model)
    # PyTorch `x.std(-1)` uses Bessel's correction (divide by N-1).
    var = (sqsum - ssum * mean) * (1.0 / (d_model - 1))
    var = jnp.maximum(var, 0.0)  # guard tiny negative values from cancellation
    std = jnp.sqrt(var)
    # Per-row reciprocal ((rows, 1)) instead of a full-tile divide.
    inv = 1.0 / (std + eps)
    return gamma * ((s - mean) * inv) + beta


def _residual_eval_kernel(x1_ref, x2_ref, g_ref, b_ref, o_ref, *, eps, d_model):
    y = _layernorm_block(x1_ref[...], x2_ref[...], g_ref[...], b_ref[...],
                         eps=eps, d_model=d_model)
    o_ref[...] = y.astype(o_ref.dtype)


def _residual_train_kernel(x1_ref, x2_ref, g_ref, b_ref, bits_ref, o_ref,
                           *, eps, d_model, threshold):
    # gamma/beta were pre-scaled by 1/(1-p) in the wrapper, so dropout is just
    # a threshold compare + select (no extra full-tile multiply).
    y = _layernorm_block(x1_ref[...], x2_ref[...], g_ref[...], b_ref[...],
                         eps=eps, d_model=d_model)
    keep = bits_ref[...] >= jnp.uint32(threshold)
    o_ref[...] = jnp.where(keep, y, jnp.float32(0.0)).astype(o_ref.dtype)


def residual_connection(x1, x2, gamma, beta, *, eps=1e-6, drop_p=0.1,
                        training=False, seed=0, row_tile=None):
    """dropout(layernorm(x1 + x2)). x1, x2: [..., d_model]."""
    assert x1.shape == x2.shape, "x1/x2 must have the same shape"
    d_model = x1.shape[-1]
    orig_shape = x1.shape
    orig_dtype = x1.dtype

    x1_2d = x1.reshape(-1, d_model)
    x2_2d = x2.reshape(-1, d_model)
    n_rows = x1_2d.shape[0]

    use_dropout = bool(training) and float(drop_p) > 0.0

    itemsize = jnp.dtype(orig_dtype).itemsize
    # Sublane multiple depends on dtype packing: 8 (f32), 16 (bf16), 32 (int8).
    sublane = max(8, 32 // itemsize)

    # ---- row_tile derivation (target ~24 MiB of double-buffered blocks) ----
    if row_tile is None:
        bytes_per_row = 3 * d_model * itemsize          # x1 + x2 + out blocks
        if use_dropout:
            bytes_per_row += 4 * d_model                # uint32 bits block
        row_tile = (24 << 20) // (2 * max(1, bytes_per_row))
    row_tile = max(sublane, (int(row_tile) // sublane) * sublane)
    row_tile = min(row_tile, 2048)
    # Never bigger than the (sublane-rounded) input.
    rows_rounded = ((n_rows + sublane - 1) // sublane) * sublane
    row_tile = min(row_tile, rows_rounded)
    # Keep >= 2 grid steps when possible so both v7x TensorCores get work.
    if n_rows > 2 * sublane:
        half = (((n_rows + 1) // 2 + sublane - 1) // sublane) * sublane
        row_tile = max(sublane, min(row_tile, half))

    grid = (pl.cdiv(n_rows, row_tile),)  # ragged last block handled by Pallas

    # ---- VMEM budget: derived from the actual block footprint --------------
    block_bytes = 2 * (3 * row_tile * d_model * itemsize
                       + (4 * row_tile * d_model if use_dropout else 0))
    scratch_bytes = 4 * row_tile * d_model * 4           # f32 intermediates
    vmem_limit = int(min(64 << 20, max(32 << 20, 2 * (block_bytes + scratch_bytes))))

    compiler_params = pltpu.CompilerParams(
        dimension_semantics=("parallel",),
        vmem_limit_bytes=vmem_limit,
    )

    g2 = gamma.reshape(1, d_model).astype(jnp.float32)
    b2 = beta.reshape(1, d_model).astype(jnp.float32)

    row_spec = pl.BlockSpec((row_tile, d_model), lambda i: (i, 0))
    vec_spec = pl.BlockSpec((1, d_model), lambda i: (0, 0))
    out_shape = jax.ShapeDtypeStruct((n_rows, d_model), orig_dtype)

    if use_dropout:
        p = float(drop_p)
        # Fold the 1/(1-p) inverted-dropout scale into gamma/beta (free).
        scale = 1.0 / (1.0 - p)
        g2 = g2 * scale
        b2 = b2 * scale
        # keep iff bits >= p * 2^32  =>  P(keep) = 1 - p.
        threshold = min(int(p * (2.0 ** 32)), 2 ** 32 - 1)
        bits = jax.random.bits(jax.random.PRNGKey(int(seed)),
                               (n_rows, d_model), dtype=jnp.uint32)
        kernel = functools.partial(_residual_train_kernel, eps=float(eps),
                                   d_model=d_model, threshold=threshold)
        out = pl.pallas_call(
            kernel,
            out_shape=out_shape,
            grid=grid,
            in_specs=[row_spec, row_spec, vec_spec, vec_spec, row_spec],
            out_specs=row_spec,
            compiler_params=compiler_params,
        )(x1_2d, x2_2d, g2, b2, bits)
    else:
        kernel = functools.partial(_residual_eval_kernel, eps=float(eps),
                                   d_model=d_model)
        out = pl.pallas_call(
            kernel,
            out_shape=out_shape,
            grid=grid,
            in_specs=[row_spec, row_spec, vec_spec, vec_spec],
            out_specs=row_spec,
            compiler_params=compiler_params,
        )(x1_2d, x2_2d, g2, b2)

    return out.reshape(orig_shape)


def _reference(x1, x2, gamma, beta, eps=1e-6):
    # Pure-JAX reference of the eval-mode forward (dropout = identity).
    s = x1 + x2
    mean = s.mean(-1, keepdims=True)
    var = ((s - mean) ** 2).sum(-1, keepdims=True) / (s.shape[-1] - 1)
    std = jnp.sqrt(var)
    return gamma * (s - mean) / (std + eps) + beta


if __name__ == "__main__":
    # Small shapes consistent with the module: batch=2, seq=8, d_model=32.
    B, S, D_MODEL = 2, 8, 32

    key = jax.random.PRNGKey(0)
    k1, k2, kg, kb = jax.random.split(key, 4)

    x1 = jax.random.normal(k1, (B, S, D_MODEL), dtype=jnp.float32)
    x2 = jax.random.normal(k2, (B, S, D_MODEL), dtype=jnp.float32)
    # Module initializes a_2=ones, b_2=zeros; use nontrivial values of the same
    # shapes to exercise the affine path.
    gamma = 1.0 + 0.1 * jax.random.normal(kg, (D_MODEL,), dtype=jnp.float32)
    beta = 0.1 * jax.random.normal(kb, (D_MODEL,), dtype=jnp.float32)

    # Eval-mode forward (dropout inactive), matching module.eval() semantics.
    y = residual_connection(x1, x2, gamma, beta, drop_p=0.1, training=False)
    y = jax.block_until_ready(y)
    y_ref = _reference(x1, x2, gamma, beta)
    assert y.shape == x1.shape
    assert jnp.allclose(y, y_ref, atol=2e-5, rtol=2e-5), "mismatch vs reference"

    # Training-mode dropout (uint32-threshold mask, 1/(1-p) folded into affine).
    # RNG stream differs from PyTorch; statistically equivalent.
    y_tr = residual_connection(x1, x2, gamma, beta, drop_p=0.1, training=True,
                               seed=123)
    y_tr = jax.block_until_ready(y_tr)
    assert y_tr.shape == x1.shape
    assert bool(jnp.all(jnp.isfinite(y_tr)))
    # Every surviving element equals the eval output scaled by 1/(1-p).
    kept = y_tr != 0
    assert jnp.allclose(jnp.where(kept, y_tr, 0.0),
                        jnp.where(kept, y_ref / 0.9, 0.0),
                        atol=2e-5, rtol=2e-5)

    print("KERNEL_OK")
</pallas_src>

<mosaic_0001>
module attributes {stable_mosaic.version = 11 : i64} {
  func.func @_residual_eval_kernel(%arg0: i32, %arg1: memref<16x32xf32, #tpu.memory_space<vmem>>, %arg2: memref<16x32xf32, #tpu.memory_space<vmem>>, %arg3: memref<1x32xf32, #tpu.memory_space<vmem>>, %arg4: memref<1x32xf32, #tpu.memory_space<vmem>>, %arg5: memref<16x32xf32, #tpu.memory_space<vmem>>) attributes {dimension_semantics = [#tpu.dimension_semantics<parallel>], iteration_bounds = array<i64: 1>, scalar_prefetch = 0 : i64, scratch_operands = 0 : i64, tpu.core_type = #tpu.core_type<tc>, window_params = [{transform_indices = @transform_0, window_bounds = array<i64: 16, 32>}, {transform_indices = @transform_1, window_bounds = array<i64: 16, 32>}, {pipeline_mode = #tpu.pipeline_mode<synchronous>, transform_indices = @transform_2, window_bounds = array<i64: 1, 32>}, {pipeline_mode = #tpu.pipeline_mode<synchronous>, transform_indices = @transform_3, window_bounds = array<i64: 1, 32>}, {transform_indices = @transform_4, window_bounds = array<i64: 16, 32>}]} {
    %c0 = arith.constant 0 : index
    %c0_0 = arith.constant 0 : index
    %0 = vector.load %arg1[%c0, %c0_0] : memref<16x32xf32, #tpu.memory_space<vmem>>, vector<16x32xf32>
    %c0_1 = arith.constant 0 : index
    %c0_2 = arith.constant 0 : index
    %1 = vector.load %arg2[%c0_1, %c0_2] : memref<16x32xf32, #tpu.memory_space<vmem>>, vector<16x32xf32>
    %c0_3 = arith.constant 0 : index
    %c0_4 = arith.constant 0 : index
    %2 = vector.load %arg3[%c0_3, %c0_4] : memref<1x32xf32, #tpu.memory_space<vmem>>, vector<1x32xf32>
    %c0_5 = arith.constant 0 : index
    %c0_6 = arith.constant 0 : index
    %3 = vector.load %arg4[%c0_5, %c0_6] : memref<1x32xf32, #tpu.memory_space<vmem>>, vector<1x32xf32>
    %4 = arith.addf %0, %1 : vector<16x32xf32>
    %cst = arith.constant dense<0.000000e+00> : vector<16xf32>
    %5 = vector.multi_reduction <add>, %4, %cst [1] : vector<16x32xf32> to vector<16xf32>
    %6 = vector.shape_cast %5 : vector<16xf32> to vector<16x1xf32>
    %7 = arith.mulf %4, %4 : vector<16x32xf32>
    %cst_7 = arith.constant dense<0.000000e+00> : vector<16xf32>
    %8 = vector.multi_reduction <add>, %7, %cst_7 [1] : vector<16x32xf32> to vector<16xf32>
    %9 = vector.shape_cast %8 : vector<16xf32> to vector<16x1xf32>
    %cst_8 = arith.constant 3.125000e-02 : f32
    %10 = vector.broadcast %cst_8 : f32 to vector<16x1xf32>
    %11 = arith.mulf %6, %10 : vector<16x1xf32>
    %12 = arith.mulf %6, %11 : vector<16x1xf32>
    %13 = arith.subf %9, %12 : vector<16x1xf32>
    %cst_9 = arith.constant 0.0322580636 : f32
    %14 = vector.broadcast %cst_9 : f32 to vector<16x1xf32>
    %15 = arith.mulf %13, %14 : vector<16x1xf32>
    %cst_10 = arith.constant 0.000000e+00 : f32
    %16 = vector.broadcast %cst_10 : f32 to vector<16x1xf32>
    %17 = arith.maximumf %15, %16 : vector<16x1xf32>
    %18 = math.sqrt %17 : vector<16x1xf32>
    %cst_11 = arith.constant 9.99999997E-7 : f32
    %19 = vector.broadcast %cst_11 : f32 to vector<16x1xf32>
    %20 = arith.addf %18, %19 : vector<16x1xf32>
    %cst_12 = arith.constant 1.000000e+00 : f32
    %21 = vector.broadcast %cst_12 : f32 to vector<16x1xf32>
    %22 = arith.divf %21, %20 : vector<16x1xf32>
    %23 = vector.broadcast %11 : vector<16x1xf32> to vector<16x32xf32>
    %24 = arith.subf %4, %23 : vector<16x32xf32>
    %25 = vector.broadcast %22 : vector<16x1xf32> to vector<16x32xf32>
    %26 = arith.mulf %24, %25 : vector<16x32xf32>
    %27 = vector.broadcast %2 : vector<1x32xf32> to vector<16x32xf32>
    %28 = arith.mulf %27, %26 : vector<16x32xf32>
    %29 = vector.broadcast %3 : vector<1x32xf32> to vector<16x32xf32>
    %30 = arith.addf %28, %29 : vector<16x32xf32>
    %c0_13 = arith.constant 0 : index
    %c0_14 = arith.constant 0 : index
    %31 = vector.load %arg5[%c0_13, %c0_14] : memref<16x32xf32, #tpu.memory_space<vmem>>, vector<16x32xf32>
    tpu.vector_store %arg5[%c0_13, %c0_14], %30 {strides = array<i32>} : memref<16x32xf32, #tpu.memory_space<vmem>>, vector<16x32xf32>,
    return
  }
  func.func @transform_0(%arg0: i32) -> (i32, i32) {
    %c0_i32 = arith.constant 0 : i32
    %c0_i32_0 = arith.constant 0 : i32
    return %arg0, %c0_i32 : i32, i32
  }
  func.func @transform_1(%arg0: i32) -> (i32, i32) {
    %c0_i32 = arith.constant 0 : i32
    %c0_i32_0 = arith.constant 0 : i32
    return %arg0, %c0_i32 : i32, i32
  }
  func.func @transform_2(%arg0: i32) -> (i32, i32) {
    %c0_i32 = arith.constant 0 : i32
    %c0_i32_0 = arith.constant 0 : i32
    %c0_i32_1 = arith.constant 0 : i32
    return %c0_i32, %c0_i32_0 : i32, i32
  }
  func.func @transform_3(%arg0: i32) -> (i32, i32) {
    %c0_i32 = arith.constant 0 : i32
    %c0_i32_0 = arith.constant 0 : i32
    %c0_i32_1 = arith.constant 0 : i32
    return %c0_i32, %c0_i32_0 : i32, i32
  }
  func.func @transform_4(%arg0: i32) -> (i32, i32) {
    %c0_i32 = arith.constant 0 : i32
    %c0_i32_0 = arith.constant 0 : i32
    return %arg0, %c0_i32 : i32, i32
  }
}

</mosaic_0001>

<llo_original>
// kernel: tpu_custom_call.1
$region0: #{tpu_custom_call.1}
  #allocation0 [shape = 'u32[]', space=smem, size = 0x4, offset = 0x4, fixed_abs, tag = 'smem constant byte address 0x4 - core index']
  #allocation1 [shape = 'u32[72,128]{1,0:T(1,128)}', space=vmem, size = 0x9000, scoped, tag = 'internal scratch']
  %s0 = inlined_call_operand.hbm [shape: f32[16,32], index: 0, kind: input, shape index: {}]
  %s1 = inlined_call_operand.hbm [shape: f32[16,32], index: 1, kind: input, shape index: {}]
  %s2 = inlined_call_operand.vmem [shape: f32[1,32], index: 2, kind: input, shape index: {}]
  %s3 = inlined_call_operand.vmem [shape: f32[1,32], index: 3, kind: input, shape index: {}]
  %s4 = inlined_call_operand.hbm [shape: f32[16,32], index: 4, kind: output, shape index: {}]
  %s5 = sld [smem:[#allocation0]]
  $region34: #{tpu_custom_call.1} parent=0
    _
  %s7 = ssub.s32 1, %s5
  %s8 = scalar_select 0, %s7, %s5
  $region1: #{tpu_custom_call.1} parent=0
    #allocation2 [shape = 'u8[8192]{0}', space=vmem, size = 0x2000, scoped, tag = 'input window, operand 0, single buffered']
    #allocation3 [shape = 's32[1]{0}', space=sflag, size = 0x4, scoped, tag = 'scoped memory for tpu_custom_call.1']
    #allocation4 [shape = 's32[1]{0}', space=sflag, size = 0x4, scoped, tag = 'scoped memory for tpu_custom_call.1']
    #allocation5 [shape = 'u8[8192]{0}', space=vmem, size = 0x2000, scoped, tag = 'input window, operand 1, single buffered']
    #allocation6 [shape = 's32[1]{0}', space=sflag, size = 0x4, scoped, tag = 'scoped memory for tpu_custom_call.1']
    #allocation7 [shape = 'u8[8192]{0}', space=vmem, size = 0x2000, scoped, tag = 'output window, operand 0, single buffered']
    %9 = vsyncpa [#allocation3], 0
    %10 = vsyncpa [#allocation6], 0
    %11 = vsyncpa [#allocation4], 0
    // Predicated region
    $region2: #{tpu_custom_call.1} parent=1 // pred_check
      _
    $region3: #{tpu_custom_call.1} parent=1 // pred_check_branch
      %13 = sbr.rel (0) target = $region5
    $region4: #{tpu_custom_call.1} parent=1 // pred_region
      %15 = vsyncadd [#allocation3], 0
      %s16 = sshll.u32 %s0, 4
      %s17 = int_to_ptr.hbm [resolvable:$true] %s16
      %s18 = sshll.u32 [#allocation2], 4
      %s19 = int_to_ptr.vmem [resolvable:$true] %s18
      %24 = dma.hbm_to_vmem [thread:$0]  %s17, 256, %s19, [#allocation3], 128, 128, 8
    $region5: #{tpu_custom_call.1} parent=1 // pred_fallthru
      _
    // Predicated region
    $region6: #{tpu_custom_call.1} parent=1 // pred_check
      _
    $region7: #{tpu_custom_call.1} parent=1 // pred_check_branch
      %26 = sbr.rel (0) target = $region9
    $region8: #{tpu_custom_call.1} parent=1 // pred_region
      %28 = vsyncadd [#allocation6], 0
      %s29 = sshll.u32 %s1, 4
      %s30 = int_to_ptr.hbm [resolvable:$true] %s29
      %s31 = sshll.u32 [#allocation5], 4
      %s32 = int_to_ptr.vmem [resolvable:$true] %s31
      %37 = dma.hbm_to_vmem [thread:$0]  %s30, 256, %s32, [#allocation6], 128, 128, 8
    $region9: #{tpu_custom_call.1} parent=1 // pred_fallthru
      _
    // Predicated region
    $region10: #{tpu_custom_call.1} parent=1 // pred_check
      _
    $region11: #{tpu_custom_call.1} parent=1 // pred_check_branch
      %39 = sbr.rel (0) target = $region13
    $region12: #{tpu_custom_call.1} parent=1 // pred_region
      _
    $region13: #{tpu_custom_call.1} parent=1 // pred_fallthru
      _
    // Predicated region
    $region14: #{tpu_custom_call.1} parent=1 // pred_check
      _
    $region15: #{tpu_custom_call.1} parent=1 // pred_check_branch
      %41 = sbr.rel (0) target = $region17
    $region16: #{tpu_custom_call.1} parent=1 // pred_region
      _
    $region17: #{tpu_custom_call.1} parent=1 // pred_fallthru
      _
    // Predicated region
    $region18: #{tpu_custom_call.1} parent=1 // pred_check
      _
    $region19: #{tpu_custom_call.1} parent=1 // pred_check_branch
      %43 = sbr.rel (0) target = $region21
    $region20: #{tpu_custom_call.1} parent=1 // pred_region
      %45 = dma.done [#allocation3], 256
    $region21: #{tpu_custom_call.1} parent=1 // pred_fallthru
      _
    // Predicated region
    $region22: #{tpu_custom_call.1} parent=1 // pred_check
      _
    $region23: #{tpu_custom_call.1} parent=1 // pred_check_branch
      %47 = sbr.rel (0) target = $region25
    $region24: #{tpu_custom_call.1} parent=1 // pred_region
      %49 = dma.done [#allocation6], 256
    $region25: #{tpu_custom_call.1} parent=1 // pred_fallthru
      _
    %v50 = vld [vmem:[#allocation2] sm:$0xff]
    %v51 = vld [vmem:[#allocation2 + $0x8] sm:$0xff]
    %v52 = vld [vmem:[#allocation5] sm:$0xff]
    %v53 = vld [vmem:[#allocation5 + $0x8] sm:$0xff]
    %v54 = vld [vmem:[%s2] sm:$0x1]
    %v55 = vld [vmem:[%s3] sm:$0x1]
    %v56 = vadd.f32 %v50, %v52
    %v57 = vadd.f32 %v51, %v53
    %vm58 = vcmask 261120
    %v59 = vsel %vm58, %v56, 0.0
    %60 = vadd.xlane.f32.xlu0 %v59
    %v61 = vpop.xlane.xlu0 %60
    %v62 = vsel %vm58, %v57, 0.0
    %63 = vadd.xlane.f32.xlu0 %v62
    %v64 = vpop.xlane.xlu0 %63
    %v65 = vmul.f32 %v56, %v56
    %v66 = vmul.f32 %v57, %v57
    %v67 = vsel %vm58, %v65, 0.0
    %68 = vadd.xlane.f32.xlu0 %v67
    %v69 = vpop.xlane.xlu0 %68
    %v70 = vsel %vm58, %v66, 0.0
    %71 = vadd.xlane.f32.xlu0 %v70
    %v72 = vpop.xlane.xlu0 %71
    %v73 = vmul.f32 %v61, 0.03125
    %v74 = vmul.f32 %v64, 0.03125
    %v75 = vmul.f32 %v61, %v73
    %v76 = vmul.f32 %v64, %v74
    %v77 = vsub.f32 %v69, %v75
    %v78 = vsub.f32 %v72, %v76
    %v79 = vmul.f32 %v77, 0.032258064
    %v80 = vmul.f32 %v78, 0.032258064
    %v81 = vmax.f32 %v79, 0.0
    %v82 = vmax.f32 %v80, 0.0
    %v83 = vrsqrt.pop %v81
    %v84 = vmul.f32 %v83, %v81
    %v85 = vmul.f32 %v84, %v83
    %v86 = vmul.f32 0.5, %v85
    %v87 = vsub.f32 1.5, %v86
    %v88 = vmul.f32 %v83, %v87
    %v89 = vmul.f32 %v81, %v88
    %vm90 = vcmp.eq.f32.partialorder %v81, inf
    %v91 = vsel %vm90, %v81, %v89
    %vm92 = vcmp.eq.f32.partialorder %v81, 0.0
    %v93 = vand.u32 %v81, 2147483648
    %v94 = vsel %vm92, %v93, %v91
    %v95 = vrsqrt.pop %v82
    %v96 = vmul.f32 %v95, %v82
    %v97 = vmul.f32 %v96, %v95
    %v98 = vmul.f32 0.5, %v97
    %v99 = vsub.f32 1.5, %v98
    %v100 = vmul.f32 %v95, %v99
    %v101 = vmul.f32 %v82, %v100
    %vm102 = vcmp.eq.f32.partialorder %v82, inf
    %v103 = vsel %vm102, %v82, %v101
    %vm104 = vcmp.eq.f32.partialorder %v82, 0.0
    %v105 = vand.u32 %v82, 2147483648
    %v106 = vsel %vm104, %v105, %v103
    %v107 = vadd.f32 %v94, 1e-06
    %v108 = vadd.f32 %v106, 1e-06
    %v109 = vrcp.pop %v107
    %v110 = vmul.f32 %v107, %v109
    %v111 = vsub.f32 1.0, %v110
    %v112 = vmul.f32 %v109, %v111
    %v113 = vadd.f32 %v109, %v112
    %vm114 = vweird.f32 %v107
    %vm115 = vweird.f32 %v109
    %vm116 = vmor %vm114, %vm115
    %v117 = vsel %vm116, %v109, %v113
    %v118 = vand.u32 2147483647, %v107
    %vm119 = vcmp.eq.f32.partialorder %v118, 8.507059e+37
    %v120 = vand.u32 %v107, 2147483648
    %v121 = vor.u32 1.1754944e-38, %v120
    %v122 = vsel %vm119, %v121, %v117
    %v123 = vmul.f32 1.0, %v122
    %v124 = vrcp.pop %v108
    %v125 = vmul.f32 %v108, %v124
    %v126 = vsub.f32 1.0, %v125
    %v127 = vmul.f32 %v124, %v126
    %v128 = vadd.f32 %v124, %v127
    %vm129 = vweird.f32 %v108
    %vm130 = vweird.f32 %v124
    %vm131 = vmor %vm129, %vm130
    %v132 = vsel %vm131, %v124, %v128
    %v133 = vand.u32 2147483647, %v108
    %vm134 = vcmp.eq.f32.partialorder %v133, 8.507059e+37
    %v135 = vand.u32 %v108, 2147483648
    %v136 = vor.u32 1.1754944e-38, %v135
    %v137 = vsel %vm134, %v136, %v132
    %v138 = vmul.f32 1.0, %v137
    %v139 = vsub.f32 %v56, %v73
    %v140 = vsub.f32 %v57, %v74
    %v141 = vmul.f32 %v139, %v123
    %v142 = vmul.f32 %v140, %v138
    %v144 = vperm.slane %v54, 0
    %v146 = vmul.f32 %v144, %v141
    %v147 = vmul.f32 %v144, %v142
    %v149 = vperm.slane %v55, 0
    %v151 = vadd.f32 %v146, %v149
    %v152 = vadd.f32 %v147, %v149
    %153 = vst.msk [vmem:[#allocation7] sm:$0xff] %vm58, %v151
    %154 = vst.msk [vmem:[#allocation7 + $0x8] sm:$0xff] %vm58, %v152
    // Predicated region
    $region26: #{tpu_custom_call.1} parent=1 // pred_check
      _
    $region27: #{tpu_custom_call.1} parent=1 // pred_check_branch
      %156 = sbr.rel (0) target = $region29
    $region28: #{tpu_custom_call.1} parent=1 // pred_region
      %158 = vsyncadd [#allocation4], 0
      %s159 = sshll.u32 [#allocation7], 4
      %s160 = int_to_ptr.vmem [resolvable:$true] %s159
      %s161 = sshll.u32 %s4, 4
      %s162 = int_to_ptr.hbm [resolvable:$true] %s161
      %167 = dma.vmem_to_hbm [thread:$0]  %s160, 256, %s162, [#allocation4], 128, 128, 8
    $region29: #{tpu_custom_call.1} parent=1 // pred_fallthru
      _
    // Predicated region
    $region30: #{tpu_custom_call.1} parent=1 // pred_check
      _
    $region31: #{tpu_custom_call.1} parent=1 // pred_check_branch
      %169 = sbr.rel (0) target = $region33
    $region32: #{tpu_custom_call.1} parent=1 // pred_region
      %171 = dma.done [#allocation4], 256
    $region33: #{tpu_custom_call.1} parent=1 // pred_fallthru
      _
    %172 = vsyncpa [#allocation3], 1
    %173 = vsyncpa [#allocation6], 1
    %174 = vsyncpa [#allocation4], 1

</llo_original>
